<compile_context>
chip_gen: v6e
topology: v6e:2x2x1
jax: 0.10.0
libtpu: 0.0.40
codegen_flags: <defaults>
</compile_context>

<pallas_src>
import jax
import jax.numpy as jnp
from jax.experimental import pallas as pl
from jax.experimental.pallas import tpu as pltpu

EPS = 1e-5  # nn.BatchNorm1d default


# ----------------------------------------------------------------------------
# Kernels
# ----------------------------------------------------------------------------
def _make_fused_kernel(eps):
    """Single-pass kernel: all N rows of a feature tile resident in VMEM."""

    def kernel(x_ref, w_ref, b_ref, o_ref):
        # x_ref: (N, TC) ; w_ref/b_ref: (1, TC) ; o_ref: (N, TC)
        x = x_ref[...].astype(jnp.float32)
        n = x.shape[0]
        inv_n = 1.0 / n

        # Per-feature batch statistics (reduce over the batch / sublane axis).
        mean = jnp.sum(x, axis=0, keepdims=True) * inv_n                # (1, TC)
        centered = x - mean                                             # stats only
        var = jnp.sum(centered * centered, axis=0, keepdims=True) * inv_n  # biased
        inv_std = jax.lax.rsqrt(var + eps)                              # (1, TC)

        # Fold affine into per-feature scale/shift: y = x * scale + shift.
        scale = w_ref[...].astype(jnp.float32) * inv_std                # (1, TC)
        shift = b_ref[...].astype(jnp.float32) - mean * scale           # (1, TC)
        o_ref[...] = (x * scale + shift).astype(o_ref.dtype)

    return kernel


def _make_stats_kernel(n_total):
    """Fallback pass 1: accumulate per-feature sum and sum-of-squares over the
    batch axis (grid axis 1, 'arbitrary'). Rows past n_total in the last batch
    tile are masked out before reduction (garbage rows would otherwise mix)."""

    def kernel(x_ref, sums_ref, s_acc, sq_acc):
        i = pl.program_id(1)  # batch-tile index (reduction axis, last in grid)

        @pl.when(i == 0)
        def _init():
            s_acc[...] = jnp.zeros_like(s_acc)
            sq_acc[...] = jnp.zeros_like(sq_acc)

        x = x_ref[...].astype(jnp.float32)
        tn = x.shape[0]
        rows = i * tn + jax.lax.broadcasted_iota(jnp.int32, x.shape, 0)
        xm = jnp.where(rows < n_total, x, 0.0)

        s_acc[...] += jnp.sum(xm, axis=0, keepdims=True)
        sq_acc[...] += jnp.sum(xm * xm, axis=0, keepdims=True)

        @pl.when(i == pl.num_programs(1) - 1)
        def _finalize():
            sums_ref[0:1, :] = s_acc[...]
            sums_ref[1:2, :] = sq_acc[...]

    return kernel


def _apply_kernel(x_ref, scale_ref, shift_ref, o_ref):
    """Fallback pass 2: elementwise y = x * scale + shift (folded affine)."""
    x = x_ref[...].astype(jnp.float32)
    o_ref[...] = (x * scale_ref[...] + shift_ref[...]).astype(o_ref.dtype)


# ----------------------------------------------------------------------------
# Tiling / VMEM planning
# ----------------------------------------------------------------------------
def _vmem_plan():
    """Generation-aware VMEM budget (for tile sizing) and scoped limit."""
    try:
        cap = int(pltpu.get_tpu_info().vmem_capacity_bytes)
    except Exception:
        cap = 64 * 1024 * 1024  # v7x per-TensorCore VMEM (smallest generation)
    budget = int(cap * 0.55)    # tiles + temps must fit here
    limit = int(cap * 0.75)     # scoped VMEM limit passed to the compiler
    return budget, limit


def _plan_single_pass(n, c, in_itemsize, out_itemsize, budget):
    """Feature-tile width (multiple of 128) for the fused one-kernel path.
    Returns None when even a 128-lane tile with all N rows resident would not
    fit the VMEM budget (-> use the two-kernel fallback)."""
    c_pad = pl.cdiv(c, 128) * 128
    # Honest per-lane accounting: double-buffered input + output tiles at their
    # storage dtypes, plus ~3 full-tile f32 working temporaries in the kernel.
    per_lane = n * (2 * in_itemsize + 2 * out_itemsize + 3 * 4)
    cap = (budget // max(per_lane, 1)) // 128 * 128
    if cap < 128:
        return None

    # Byte-targeted tile: >= ~2 MiB of streamed input per grid step so the
    # fixed per-step overhead is amortized (matters most for small N / v7x).
    target_bytes = 2 * 1024 * 1024
    want = -(-target_bytes // max(1, n * in_itemsize))
    want = max(512, pl.cdiv(want, 128) * 128)

    tc = int(min(cap, want, c_pad))

    # v7x megacore balance: prefer an even tile count (>= 2) along C.
    num_tiles = pl.cdiv(c_pad, tc)
    if num_tiles % 2 == 1 and c_pad >= 256:
        tc_even = pl.cdiv(c_pad // 128, num_tiles + 1) * 128
        if 128 <= tc_even <= cap:
            tc = int(tc_even)
    return tc


def _plan_two_pass(n, c, in_itemsize, out_itemsize, budget):
    """(tn, tc) for the large-N fallback: lane-dense feature tiles, batch tiled."""
    c_pad = pl.cdiv(c, 128) * 128
    tc = int(min(512, c_pad))
    per_row = tc * (2 * in_itemsize + 2 * out_itemsize + 2 * 4)
    tn = (budget // max(per_row, 1)) // 8 * 8
    tn = int(max(8, min(tn, pl.cdiv(n, 8) * 8, 4096)))
    return tn, tc


# ----------------------------------------------------------------------------
# Public wrapper
# ----------------------------------------------------------------------------
def meta_batch_norm1d(x, weight, bias, *, eps=EPS):
    """x: (N, C); weight, bias: (C,). Returns training-mode batch norm of x."""
    assert x.ndim == 2, "this kernel implements the (N, num_features) case"
    n, c = x.shape
    in_sz = x.dtype.itemsize
    out_sz = x.dtype.itemsize
    budget, vmem_limit = _vmem_plan()

    w2 = weight.reshape(1, c)
    b2 = bias.reshape(1, c)

    tc = _plan_single_pass(n, c, in_sz, out_sz, budget)
    if tc is not None:
        # Fused single pass: 1 read + 1 write of x (HBM-bandwidth floor).
        grid = (pl.cdiv(c, tc),)
        return pl.pallas_call(
            _make_fused_kernel(eps),
            out_shape=jax.ShapeDtypeStruct((n, c), x.dtype),
            grid=grid,
            in_specs=[
                pl.BlockSpec((n, tc), lambda j: (0, j)),
                pl.BlockSpec((1, tc), lambda j: (0, j)),
                pl.BlockSpec((1, tc), lambda j: (0, j)),
            ],
            out_specs=pl.BlockSpec((n, tc), lambda j: (0, j)),
            compiler_params=pltpu.CompilerParams(
                dimension_semantics=("parallel",),
                vmem_limit_bytes=vmem_limit,
            ),
        )(x, w2, b2)

    # ---- Large-N fallback: two kernels (stats, then apply). ----
    tn, tc = _plan_two_pass(n, c, in_sz, out_sz, budget)
    grid = (pl.cdiv(c, tc), pl.cdiv(n, tn))

    sums = pl.pallas_call(
        _make_stats_kernel(n),
        out_shape=jax.ShapeDtypeStruct((2, c), jnp.float32),
        grid=grid,
        in_specs=[pl.BlockSpec((tn, tc), lambda j, i: (i, j))],
        out_specs=pl.BlockSpec((2, tc), lambda j, i: (0, j)),
        scratch_shapes=[
            pltpu.VMEM((1, tc), jnp.float32),
            pltpu.VMEM((1, tc), jnp.float32),
        ],
        compiler_params=pltpu.CompilerParams(
            dimension_semantics=("parallel", "arbitrary"),
            vmem_limit_bytes=vmem_limit,
        ),
    )(x)

    # O(C) host-side fold of the affine into per-feature scale/shift.
    inv_n = 1.0 / n
    mean = sums[0] * inv_n
    var = jnp.maximum(sums[1] * inv_n - mean * mean, 0.0)
    inv_std = jax.lax.rsqrt(var + eps)
    w32 = weight.astype(jnp.float32)
    scale = (w32 * inv_std).reshape(1, c)
    shift = (bias.astype(jnp.float32) - mean * w32 * inv_std).reshape(1, c)

    return pl.pallas_call(
        _apply_kernel,
        out_shape=jax.ShapeDtypeStruct((n, c), x.dtype),
        grid=grid,
        in_specs=[
            pl.BlockSpec((tn, tc), lambda j, i: (i, j)),
            pl.BlockSpec((1, tc), lambda j, i: (0, j)),
            pl.BlockSpec((1, tc), lambda j, i: (0, j)),
        ],
        out_specs=pl.BlockSpec((tn, tc), lambda j, i: (i, j)),
        compiler_params=pltpu.CompilerParams(
            dimension_semantics=("parallel", "parallel"),
            vmem_limit_bytes=vmem_limit,
        ),
    )(x, scale, shift)


# ----------------------------------------------------------------------------
# Reference + test
# ----------------------------------------------------------------------------
def _reference(x, weight, bias):
    mean = jnp.mean(x, axis=0, keepdims=True)
    var = jnp.mean((x - mean) ** 2, axis=0, keepdims=True)  # biased variance
    return (x - mean) / jnp.sqrt(var + EPS) * weight[None, :] + bias[None, :]


if __name__ == "__main__":
    key = jax.random.PRNGKey(0)
    kx, kw, kb = jax.random.split(key, 3)

    batch, num_features = 8, 32
    x = jax.random.normal(kx, (batch, num_features), dtype=jnp.float32)
    # PyTorch default init is weight=1, bias=0; use random values for a
    # non-trivial affine check.
    weight = 1.0 + 0.1 * jax.random.normal(kw, (num_features,), dtype=jnp.float32)
    bias = 0.1 * jax.random.normal(kb, (num_features,), dtype=jnp.float32)

    out = meta_batch_norm1d(x, weight, bias)
    out = jax.block_until_ready(out)

    ref = _reference(x, weight, bias)
    assert out.shape == ref.shape, "shape mismatch vs reference"
    assert jnp.allclose(out, ref, atol=1e-5, rtol=1e-5), "mismatch vs reference"

    print("KERNEL_OK")
</pallas_src>

<mosaic_0001>
module attributes {stable_mosaic.version = 11 : i64} {
  func.func @kernel(%arg0: i32, %arg1: memref<8x128xf32, #tpu.memory_space<vmem>>, %arg2: memref<1x128xf32, #tpu.memory_space<vmem>>, %arg3: memref<1x128xf32, #tpu.memory_space<vmem>>, %arg4: memref<8x128xf32, #tpu.memory_space<vmem>>) attributes {dimension_semantics = [#tpu.dimension_semantics<parallel>], iteration_bounds = array<i64: 1>, scalar_prefetch = 0 : i64, scratch_operands = 0 : i64, tpu.core_type = #tpu.core_type<tc>, window_params = [{transform_indices = @transform_0, window_bounds = array<i64: 8, 128>}, {transform_indices = @transform_1, window_bounds = array<i64: 1, 128>}, {transform_indices = @transform_2, window_bounds = array<i64: 1, 128>}, {transform_indices = @transform_3, window_bounds = array<i64: 8, 128>}]} {
    %c0 = arith.constant 0 : index
    %c0_0 = arith.constant 0 : index
    %0 = vector.load %arg1[%c0, %c0_0] : memref<8x128xf32, #tpu.memory_space<vmem>>, vector<8x128xf32>
    %cst = arith.constant dense<0.000000e+00> : vector<128xf32>
    %1 = vector.multi_reduction <add>, %0, %cst [0] : vector<8x128xf32> to vector<128xf32>
    %2 = vector.shape_cast %1 : vector<128xf32> to vector<1x128xf32>
    %cst_1 = arith.constant 1.250000e-01 : f32
    %3 = vector.broadcast %cst_1 : f32 to vector<1x128xf32>
    %4 = arith.mulf %2, %3 : vector<1x128xf32>
    %5 = vector.broadcast %4 : vector<1x128xf32> to vector<8x128xf32>
    %6 = arith.subf %0, %5 : vector<8x128xf32>
    %7 = arith.mulf %6, %6 : vector<8x128xf32>
    %cst_2 = arith.constant dense<0.000000e+00> : vector<128xf32>
    %8 = vector.multi_reduction <add>, %7, %cst_2 [0] : vector<8x128xf32> to vector<128xf32>
    %9 = vector.shape_cast %8 : vector<128xf32> to vector<1x128xf32>
    %cst_3 = arith.constant 1.250000e-01 : f32
    %10 = vector.broadcast %cst_3 : f32 to vector<1x128xf32>
    %11 = arith.mulf %9, %10 : vector<1x128xf32>
    %cst_4 = arith.constant 9.99999974E-6 : f32
    %12 = vector.broadcast %cst_4 : f32 to vector<1x128xf32>
    %13 = arith.addf %11, %12 : vector<1x128xf32>
    %14 = math.rsqrt %13 : vector<1x128xf32>
    %c0_5 = arith.constant 0 : index
    %c0_6 = arith.constant 0 : index
    %15 = vector.load %arg2[%c0_5, %c0_6] : memref<1x128xf32, #tpu.memory_space<vmem>>, vector<1x128xf32>
    %16 = arith.mulf %15, %14 : vector<1x128xf32>
    %c0_7 = arith.constant 0 : index
    %c0_8 = arith.constant 0 : index
    %17 = vector.load %arg3[%c0_7, %c0_8] : memref<1x128xf32, #tpu.memory_space<vmem>>, vector<1x128xf32>
    %18 = arith.mulf %4, %16 : vector<1x128xf32>
    %19 = arith.subf %17, %18 : vector<1x128xf32>
    %20 = vector.broadcast %16 : vector<1x128xf32> to vector<8x128xf32>
    %21 = arith.mulf %0, %20 : vector<8x128xf32>
    %22 = vector.broadcast %19 : vector<1x128xf32> to vector<8x128xf32>
    %23 = arith.addf %21, %22 : vector<8x128xf32>
    %c0_9 = arith.constant 0 : index
    %c0_10 = arith.constant 0 : index
    %24 = vector.load %arg4[%c0_9, %c0_10] : memref<8x128xf32, #tpu.memory_space<vmem>>, vector<8x128xf32>
    tpu.vector_store %arg4[%c0_9, %c0_10], %23 {strides = array<i32>} : memref<8x128xf32, #tpu.memory_space<vmem>>, vector<8x128xf32>,
    return
  }
  func.func @transform_0(%arg0: i32) -> (i32, i32) {
    %c0_i32 = arith.constant 0 : i32
    %c0_i32_0 = arith.constant 0 : i32
    return %c0_i32, %arg0 : i32, i32
  }
  func.func @transform_1(%arg0: i32) -> (i32, i32) {
    %c0_i32 = arith.constant 0 : i32
    %c0_i32_0 = arith.constant 0 : i32
    return %c0_i32, %arg0 : i32, i32
  }
  func.func @transform_2(%arg0: i32) -> (i32, i32) {
    %c0_i32 = arith.constant 0 : i32
    %c0_i32_0 = arith.constant 0 : i32
    return %c0_i32, %arg0 : i32, i32
  }
  func.func @transform_3(%arg0: i32) -> (i32, i32) {
    %c0_i32 = arith.constant 0 : i32
    %c0_i32_0 = arith.constant 0 : i32
    return %c0_i32, %arg0 : i32, i32
  }
}

</mosaic_0001>

<llo_original>
// kernel: tpu_custom_call.1
$region0: #{tpu_custom_call.1}
  #allocation0 [shape = 'u32[]', space=smem, size = 0x4, offset = 0x4, fixed_abs, tag = 'smem constant byte address 0x4 - core index']
  #allocation1 [shape = 'u32[144,128]{1,0:T(1,128)}', space=vmem, size = 0x12000, scoped, tag = 'internal scratch']
  %s0 = inlined_call_operand.hbm [shape: f32[8,32], index: 0, kind: input, shape index: {}]
  %s1 = inlined_call_operand.vmem [shape: f32[1,32], index: 1, kind: input, shape index: {}]
  %s2 = inlined_call_operand.vmem [shape: f32[1,32], index: 2, kind: input, shape index: {}]
  %s3 = inlined_call_operand.hbm [shape: f32[8,32], index: 3, kind: output, shape index: {}]
  %s4 = sld [smem:[#allocation0]]
  $region26: #{tpu_custom_call.1} parent=0
    _
  %s6 = ssub.s32 1, %s4
  %s7 = scalar_select 0, %s6, %s4
  $region1: #{tpu_custom_call.1} parent=0
    #allocation2 [shape = 'u8[4096]{0}', space=vmem, size = 0x1000, scoped, tag = 'input window, operand 0, single buffered']
    #allocation3 [shape = 's32[1]{0}', space=sflag, size = 0x4, scoped, tag = 'scoped memory for tpu_custom_call.1']
    #allocation4 [shape = 's32[1]{0}', space=sflag, size = 0x4, scoped, tag = 'scoped memory for tpu_custom_call.1']
    #allocation5 [shape = 'u8[4096]{0}', space=vmem, size = 0x1000, scoped, tag = 'output window, operand 0, single buffered']
    %8 = vsyncpa [#allocation3], 0
    %9 = vsyncpa [#allocation4], 0
    // Predicated region
    $region2: #{tpu_custom_call.1} parent=1 // pred_check
      _
    $region3: #{tpu_custom_call.1} parent=1 // pred_check_branch
      %11 = sbr.rel (0) target = $region5
    $region4: #{tpu_custom_call.1} parent=1 // pred_region
      %s13 = ssub.s32 128, 128
      %14 = vsyncadd [#allocation3], %s13
      %s16 = sshll.u32 [#allocation2], 4
      %s17 = int_to_ptr.vmem [resolvable:$true] %s16
      %19 = dma.hbm_to_vmem [thread:$0]  %s0, 128, %s17, [#allocation3]
    $region5: #{tpu_custom_call.1} parent=1 // pred_fallthru
      _
    // Predicated region
    $region6: #{tpu_custom_call.1} parent=1 // pred_check
      _
    $region7: #{tpu_custom_call.1} parent=1 // pred_check_branch
      %21 = sbr.rel (0) target = $region9
    $region8: #{tpu_custom_call.1} parent=1 // pred_region
      _
    $region9: #{tpu_custom_call.1} parent=1 // pred_fallthru
      _
    // Predicated region
    $region10: #{tpu_custom_call.1} parent=1 // pred_check
      _
    $region11: #{tpu_custom_call.1} parent=1 // pred_check_branch
      %23 = sbr.rel (0) target = $region13
    $region12: #{tpu_custom_call.1} parent=1 // pred_region
      _
    $region13: #{tpu_custom_call.1} parent=1 // pred_fallthru
      _
    // Predicated region
    $region14: #{tpu_custom_call.1} parent=1 // pred_check
      _
    $region15: #{tpu_custom_call.1} parent=1 // pred_check_branch
      %25 = sbr.rel (0) target = $region17
    $region16: #{tpu_custom_call.1} parent=1 // pred_region
      %26 = dma.done [#allocation3], 128
    $region17: #{tpu_custom_call.1} parent=1 // pred_fallthru
      _
    %v27 = vld [vmem:[#allocation2] sm:$0xff]
    %v28 = vrot.slane %v27, 4
    %v29 = vadd.f32 %v27, %v28
    %v30 = vrot.slane %v29, 2
    %v31 = vadd.f32 %v29, %v30
    %v32 = vrot.slane %v31, 1
    %v33 = vadd.f32 %v31, %v32
    %v34 = vmul.f32 %v33, 0.125
    %v35 = vsub.f32 %v27, %v34
    %v36 = vmul.f32 %v35, %v35
    %v37 = vrot.slane %v36, 4
    %v38 = vadd.f32 %v36, %v37
    %v39 = vrot.slane %v38, 2
    %v40 = vadd.f32 %v38, %v39
    %v41 = vrot.slane %v40, 1
    %v42 = vadd.f32 %v40, %v41
    %v43 = vmul.f32 %v42, 0.125
    %v44 = vadd.f32 %v43, 1e-05
    %v45 = vrsqrt.pop %v44
    %v46 = vld [vmem:[%s1] sm:$0x1]
    %v47 = vmul.f32 %v46, %v45
    %v48 = vld [vmem:[%s2] sm:$0x1]
    %v49 = vmul.f32 %v34, %v47
    %v50 = vsub.f32 %v48, %v49
    %v52 = vlaneseq
    %v53 = vshrl.u32 %v52, 7
    %v54 = vsub.s32 0, %v53
    %v55 = vrot.slane %v47, %v54
    %v57 = vmul.f32 %v27, %v55
    %v59 = vlaneseq
    %v60 = vshrl.u32 %v59, 7
    %v61 = vsub.s32 0, %v60
    %v62 = vrot.slane %v50, %v61
    %v64 = vadd.f32 %v57, %v62
    %65 = vst [vmem:[#allocation5] sm:$0xff] %v64
    // Predicated region
    $region18: #{tpu_custom_call.1} parent=1 // pred_check
      _
    $region19: #{tpu_custom_call.1} parent=1 // pred_check_branch
      %67 = sbr.rel (0) target = $region21
    $region20: #{tpu_custom_call.1} parent=1 // pred_region
      %s69 = ssub.s32 128, 128
      %70 = vsyncadd [#allocation4], %s69
      %s72 = sshll.u32 [#allocation5], 4
      %s73 = int_to_ptr.vmem [resolvable:$true] %s72
      %75 = dma.vmem_to_hbm [thread:$0]  %s73, 128, %s3, [#allocation4]
    $region21: #{tpu_custom_call.1} parent=1 // pred_fallthru
      _
    // Predicated region
    $region22: #{tpu_custom_call.1} parent=1 // pred_check
      _
    $region23: #{tpu_custom_call.1} parent=1 // pred_check_branch
      %77 = sbr.rel (0) target = $region25
    $region24: #{tpu_custom_call.1} parent=1 // pred_region
      %78 = dma.done [#allocation4], 128
    $region25: #{tpu_custom_call.1} parent=1 // pred_fallthru
      _
    %79 = vsyncpa [#allocation3], 1
    %80 = vsyncpa [#allocation4], 1

</llo_original>
